<compile_context>
chip_gen: v6e
topology: v6e:2x2x1
jax: 0.10.0
libtpu: 0.0.40
codegen_flags: <defaults>
</compile_context>

<pallas_src>
import functools

import jax
import jax.numpy as jnp
from jax import lax
from jax.experimental import pallas as pl
from jax.experimental.pallas import tpu as pltpu


def _round_up(n, m):
    return -(-n // m) * m


# ----------------------------------------------------------------------------
# Pallas kernel: full DKLGP forward for one block of batch rows.
# ----------------------------------------------------------------------------
def _dklgp_kernel(x_ref, w1_ref, b1_ref, w2_ref, b2_ref,
                  zts_ref, zsq_ref, a_ref, w3_ref, b3_ref, eps_ref,
                  out_ref, *, inv_ls, outputscale, num_bins, approx_recip):
    def mm_fast(a, w):
        # Weight may be pre-cast to bf16 host-side; only the streamed
        # activation is cast in-kernel.  f32 accumulation on the MXU.
        return jnp.dot(a.astype(w.dtype), w, preferred_element_type=jnp.float32)

    def mm_f32(a, w):
        # Numerically sensitive matmuls stay f32 regardless of the bf16 path.
        return jnp.dot(a, w, preferred_element_type=jnp.float32)

    # --- feature extractor: Linear -> ReLU -> Linear -> ReLU -----------------
    x = x_ref[...]
    h = jnp.maximum(mm_fast(x, w1_ref[...]) + b1_ref[...], 0.0)
    feats = jnp.maximum(mm_fast(h, w2_ref[...]) + b2_ref[...], 0.0)

    # --- scaled RBF cross-covariance k(features, Z) (M padded to 128) --------
    # Kept in f32 even on the bf16 path: sq_dist = f_sq + zsq - 2*cross is a
    # catastrophic cancellation for points near inducing locations.
    f_s = feats * inv_ls                                    # [bn, H]
    f_sq = jnp.sum(f_s * f_s, axis=-1, keepdims=True)       # [bn, 1]
    cross = mm_f32(f_s, zts_ref[...])                       # [bn, Mp]
    sq_dist = jnp.maximum(f_sq + zsq_ref[...] - 2.0 * cross, 0.0)
    k_xz = outputscale * jnp.exp(-0.5 * sq_dist)            # padded cols -> exactly 0

    # --- GP predictive variance: diag(K_xx) + k A k^T (A zero-padded, f32) ---
    ka = mm_f32(k_xz, a_ref[...])                           # [bn, Mp]
    quad = jnp.sum(ka * k_xz, axis=-1, keepdims=True)       # [bn, 1]
    gp_var = outputscale + quad                             # unclamped (matches torch)

    # --- epistemic perturbation + final linear layer + softmax ---------------
    gp_var_c = jnp.maximum(gp_var, 1e-12)                   # A indefinite -> clamp before sqrt
    std = gp_var_c * lax.rsqrt(gp_var_c)                    # sqrt via EUP rsqrt (free slot)
    pert = feats + eps_ref[...] * std                       # broadcast [bn,1] over H
    logits = mm_fast(pert, w3_ref[...]) + b3_ref[...]       # [bn, OUT_W]; pad cols = -1e30
    m = jnp.max(logits, axis=-1, keepdims=True)
    e = jnp.exp(logits - m)                                 # pad cols -> exactly 0
    inv_den = pl.reciprocal(jnp.sum(e, axis=-1, keepdims=True), approx=approx_recip)
    probs = e * inv_den                                     # pad cols stay 0

    # --- lane-dense packed output: probs in cols [0,B), gp_var in col B ------
    bn, out_w = out_ref.shape
    col = lax.broadcasted_iota(jnp.int32, (bn, out_w), 1)
    gp_var_b = jnp.broadcast_to(gp_var, (bn, out_w))
    out_ref[...] = jnp.where(col == num_bins, gp_var_b, probs).astype(out_ref.dtype)


# ----------------------------------------------------------------------------
# Wrapper: block selection, row padding, BlockSpecs / grid, pallas_call.
# ----------------------------------------------------------------------------
def dklgp_forward(x, params, eps, *, block_n=None, use_bf16=False,
                  out_dtype=jnp.float32):
    N, D = x.shape
    H = params["w1"].shape[1]
    B = params["w3"].shape[1]            # real num_bins
    zts_p = params["zt_s_pad"]           # [H, Mp]   (always f32)
    zsq_p = params["zsq_pad"]            # [1, Mp]   (always f32)
    a_p = params["a_pad"]                # [Mp, Mp]  (always f32)
    Mp = zts_p.shape[1]

    # Static weights: use the host-side pre-cast bf16 copies on the fast path
    # (no per-step converts, half the weight DMA / VMEM).  Biases stay f32.
    if use_bf16:
        w1_k, w2_k, w3_k = params["w1_bf16"], params["w2_bf16"], params["w3_pad_bf16"]
    else:
        w1_k, w2_k, w3_k = params["w1"], params["w2"], params["w3_pad"]
    b3_p = params["b3_pad"]              # [1, OUT_W]
    OUT_W = w3_k.shape[1]

    # Block selection: full batch for small N; otherwise up to 256 rows/step
    # with at least two grid steps so v7x can shard the parallel axis across
    # its 2 TensorCores (harmless on v5e/v6e).
    if block_n is None:
        if N <= 128:
            block_n = N
        else:
            block_n = min(256, _round_up(-(-N // 2), 8))

    # Zero-pad rows so N divides evenly into blocks (output sliced back below).
    n_blocks = pl.cdiv(N, block_n)
    N_pad = n_blocks * block_n
    if N_pad != N:
        pad = N_pad - N
        x = jnp.pad(x, ((0, pad), (0, 0)))
        eps = jnp.pad(eps, ((0, pad), (0, 0)))
    grid = (n_blocks,)

    kernel = functools.partial(
        _dklgp_kernel,
        inv_ls=float(1.0 / params["lengthscale"]),
        outputscale=float(params["outputscale"]),
        num_bins=B,
        approx_recip=bool(use_bf16),     # approx EUP reciprocal only on fast path
    )

    operands = (x, w1_k, params["b1"], w2_k, params["b2"],
                zts_p, zsq_p, a_p, w3_k, b3_p, eps)
    flops = 2 * N_pad * (D * H + H * H + H * Mp + Mp * Mp + H * OUT_W)
    transcendentals = N_pad * (Mp + OUT_W + 2)
    out_itemsize = jnp.dtype(out_dtype).itemsize
    bytes_accessed = int(sum(o.size * o.dtype.itemsize for o in operands)
                         + N_pad * OUT_W * out_itemsize)

    full = lambda shape: pl.BlockSpec(shape, lambda i: (0, 0))
    batched = lambda shape: pl.BlockSpec(shape, lambda i: (i, 0))

    out = pl.pallas_call(
        kernel,
        out_shape=jax.ShapeDtypeStruct((N_pad, OUT_W), out_dtype),
        grid=grid,
        in_specs=[
            batched((block_n, D)),      # x
            full((D, H)),               # w1 (f32 or pre-cast bf16)
            full((1, H)),               # b1
            full((H, H)),               # w2 (f32 or pre-cast bf16)
            full((1, H)),               # b2
            full((H, Mp)),              # Z^T / lengthscale (lane-padded, f32)
            full((1, Mp)),              # ||Z/ls||^2 (pad lanes = 1e9 -> k_xz pad = 0)
            full((Mp, Mp)),             # A = L^{-T} (S - I) L^{-1} (zero-padded, f32)
            full((H, OUT_W)),           # w3 (zero-padded columns; f32 or bf16)
            full((1, OUT_W)),           # b3 (pad columns = -1e30)
            batched((block_n, H)),      # eps (randn_like noise)
        ],
        out_specs=batched((block_n, OUT_W)),
        compiler_params=pltpu.CompilerParams(
            dimension_semantics=("parallel",)),
        cost_estimate=pl.CostEstimate(
            flops=flops, transcendentals=transcendentals,
            bytes_accessed=bytes_accessed),
    )(*operands)

    out = out[:N]
    probs = out[:, :B]
    gp_var = out[:, B].astype(jnp.float32)   # matches torch shape [N]
    return probs, gp_var


# ----------------------------------------------------------------------------
# Deterministic parameter construction (synthetic "checkpoint") + padded glue.
# ----------------------------------------------------------------------------
def init_params(key, input_dim, hidden_dim, num_inducing, num_bins):
    ks = jax.random.split(key, 9)
    scale = 0.3
    w1 = scale * jax.random.normal(ks[0], (input_dim, hidden_dim), jnp.float32)
    b1 = scale * jax.random.normal(ks[1], (1, hidden_dim), jnp.float32)
    w2 = scale * jax.random.normal(ks[2], (hidden_dim, hidden_dim), jnp.float32)
    b2 = scale * jax.random.normal(ks[3], (1, hidden_dim), jnp.float32)
    w3 = scale * jax.random.normal(ks[4], (hidden_dim, num_bins), jnp.float32)
    b3 = scale * jax.random.normal(ks[5], (1, num_bins), jnp.float32)

    # GP hyperparameters (positive-constrained values chosen directly).
    lengthscale = jnp.float32(0.8)
    outputscale = jnp.float32(1.3)

    # Inducing points (torch.randn(100, hidden_dim) analogue).
    z = jax.random.normal(ks[6], (num_inducing, hidden_dim), jnp.float32)

    # Variational distribution covariance S = L_var L_var^T.
    # (The variational mean / ConstantMean only feed gp_mean, which is dead
    #  code in the original forward, so it is omitted.)
    l_var = (jnp.tril(0.1 * jax.random.normal(ks[8], (num_inducing, num_inducing), jnp.float32))
             + 0.9 * jnp.eye(num_inducing, dtype=jnp.float32))
    s_var = l_var @ l_var.T

    # Parameter-only precomputation of the whitened variational strategy terms.
    z_s = z / lengthscale
    zz_sq = (jnp.sum(z_s * z_s, axis=1, keepdims=True)
             + jnp.sum(z_s * z_s, axis=1)[None, :]
             - 2.0 * z_s @ z_s.T)
    k_zz = outputscale * jnp.exp(-0.5 * jnp.maximum(zz_sq, 0.0))
    jitter = 1e-4
    chol = jnp.linalg.cholesky(k_zz + jitter * jnp.eye(num_inducing, dtype=jnp.float32))
    l_inv = jax.scipy.linalg.solve_triangular(
        chol, jnp.eye(num_inducing, dtype=jnp.float32), lower=True)
    a = l_inv.T @ (s_var - jnp.eye(num_inducing, dtype=jnp.float32)) @ l_inv

    zt_s = jnp.asarray(z_s.T)                                # [H, M]
    zsq = jnp.sum(z_s * z_s, axis=1)[None, :]                # [1, M]

    # ---- lane-dense padded copies for the kernel ----------------------------
    Mp = _round_up(num_inducing, 128)
    OUT_W = _round_up(num_bins + 1, 128)   # probs cols + one gp_var column
    zt_s_pad = jnp.zeros((hidden_dim, Mp), jnp.float32).at[:, :num_inducing].set(zt_s)
    zsq_pad = jnp.full((1, Mp), 1e9, jnp.float32).at[:, :num_inducing].set(zsq)
    a_pad = jnp.zeros((Mp, Mp), jnp.float32).at[:num_inducing, :num_inducing].set(a)
    w3_pad = jnp.zeros((hidden_dim, OUT_W), jnp.float32).at[:, :num_bins].set(w3)
    b3_pad = jnp.full((1, OUT_W), -1e30, jnp.float32).at[:, :num_bins].set(b3)

    return {
        "w1": w1, "b1": b1, "w2": w2, "b2": b2, "w3": w3, "b3": b3,
        "lengthscale": lengthscale, "outputscale": outputscale,
        # unpadded (used by the pure-JAX reference)
        "zt_s": zt_s, "zsq": zsq, "a": a,
        # lane-padded kernel glue (f32)
        "zt_s_pad": zt_s_pad, "zsq_pad": zsq_pad, "a_pad": a_pad,
        "w3_pad": w3_pad, "b3_pad": b3_pad,
        # host-side pre-cast bf16 copies of the static MLP/final weights
        # (one-time cast; the RBF/quadratic-form operands stay f32 on purpose)
        "w1_bf16": w1.astype(jnp.bfloat16),
        "w2_bf16": w2.astype(jnp.bfloat16),
        "w3_pad_bf16": w3_pad.astype(jnp.bfloat16),
    }


# ----------------------------------------------------------------------------
# Pure-JAX reference (same math on the UNPADDED params) for correctness check.
# ----------------------------------------------------------------------------
def reference_forward(x, params, eps):
    h = jnp.maximum(x @ params["w1"] + params["b1"], 0.0)
    f = jnp.maximum(h @ params["w2"] + params["b2"], 0.0)
    inv_ls = 1.0 / params["lengthscale"]
    f_s = f * inv_ls
    sq = (jnp.sum(f_s * f_s, -1, keepdims=True) + params["zsq"]
          - 2.0 * f_s @ params["zt_s"])
    k_xz = params["outputscale"] * jnp.exp(-0.5 * jnp.maximum(sq, 0.0))
    var = params["outputscale"] + jnp.sum((k_xz @ params["a"]) * k_xz, -1, keepdims=True)
    std = jnp.sqrt(jnp.maximum(var, 1e-12))
    logits = (f + eps * std) @ params["w3"] + params["b3"]
    probs = jax.nn.softmax(logits, axis=-1)
    return probs, var.reshape(-1)


if __name__ == "__main__":
    N, D, H, M, B = 16, 16, 32, 100, 8   # batch, input_dim, hidden_dim, inducing, num_bins

    key = jax.random.PRNGKey(0)
    k_x, k_p, k_eps, k_x2, k_eps2 = jax.random.split(key, 5)
    x = jax.random.normal(k_x, (N, D), jnp.float32)
    params = init_params(k_p, D, H, M, B)
    # torch.randn_like(features) equivalent, sampled deterministically on host.
    eps = jax.random.normal(k_eps, (N, H), jnp.float32)

    # --- f32 path (bit-accurate-ish): single grid step, lane-padded operands.
    probs, gp_var = dklgp_forward(x, params, eps)
    jax.block_until_ready((probs, gp_var))

    probs_ref, var_ref = reference_forward(x, params, eps)
    assert probs.shape == (N, B) and gp_var.shape == (N,)
    assert bool(jnp.allclose(probs, probs_ref, atol=1e-5, rtol=1e-5))
    assert bool(jnp.allclose(gp_var, var_ref, atol=1e-5, rtol=1e-5))
    assert bool(jnp.allclose(jnp.sum(probs, axis=-1), 1.0, atol=1e-5))

    # --- larger batch: exercises multi-step grid (>=2 steps) + row padding.
    N2 = 200
    x2 = jax.random.normal(k_x2, (N2, D), jnp.float32)
    eps2 = jax.random.normal(k_eps2, (N2, H), jnp.float32)
    probs2, var2 = dklgp_forward(x2, params, eps2)
    jax.block_until_ready((probs2, var2))
    probs2_ref, var2_ref = reference_forward(x2, params, eps2)
    assert probs2.shape == (N2, B) and var2.shape == (N2,)
    assert bool(jnp.allclose(probs2, probs2_ref, atol=1e-5, rtol=1e-5))
    assert bool(jnp.allclose(var2, var2_ref, atol=1e-5, rtol=1e-5))

    # --- bf16-operand MXU path (all generations; static weights pre-cast,
    #     RBF / quadratic form kept in f32, bf16 packed-output slab).
    probs_bf, var_bf = dklgp_forward(x, params, eps, use_bf16=True,
                                     out_dtype=jnp.bfloat16)
    jax.block_until_ready((probs_bf, var_bf))
    assert probs_bf.shape == (N, B) and var_bf.shape == (N,)
    assert bool(jnp.allclose(probs_bf.astype(jnp.float32), probs_ref, atol=5e-2, rtol=5e-2))
    assert bool(jnp.allclose(var_bf, var_ref, atol=5e-2, rtol=5e-2))
    assert bool(jnp.allclose(jnp.sum(probs_bf.astype(jnp.float32), axis=-1), 1.0, atol=1e-2))

    print("KERNEL_OK")
</pallas_src>

<mosaic_0001>
module attributes {stable_mosaic.version = 11 : i64} {
  func.func @_dklgp_kernel(%arg0: i32, %arg1: memref<16x16xf32, #tpu.memory_space<vmem>>, %arg2: memref<16x32xf32, #tpu.memory_space<vmem>>, %arg3: memref<1x32xf32, #tpu.memory_space<vmem>>, %arg4: memref<32x32xf32, #tpu.memory_space<vmem>>, %arg5: memref<1x32xf32, #tpu.memory_space<vmem>>, %arg6: memref<32x128xf32, #tpu.memory_space<vmem>>, %arg7: memref<1x128xf32, #tpu.memory_space<vmem>>, %arg8: memref<128x128xf32, #tpu.memory_space<vmem>>, %arg9: memref<32x128xf32, #tpu.memory_space<vmem>>, %arg10: memref<1x128xf32, #tpu.memory_space<vmem>>, %arg11: memref<16x32xf32, #tpu.memory_space<vmem>>, %arg12: memref<16x128xf32, #tpu.memory_space<vmem>>) attributes {dimension_semantics = [#tpu.dimension_semantics<parallel>], iteration_bounds = array<i64: 1>, scalar_prefetch = 0 : i64, scratch_operands = 0 : i64, tpu.core_type = #tpu.core_type<tc>, window_params = [{transform_indices = @transform_0, window_bounds = array<i64: 16, 16>}, {pipeline_mode = #tpu.pipeline_mode<synchronous>, transform_indices = @transform_1, window_bounds = array<i64: 16, 32>}, {pipeline_mode = #tpu.pipeline_mode<synchronous>, transform_indices = @transform_2, window_bounds = array<i64: 1, 32>}, {pipeline_mode = #tpu.pipeline_mode<synchronous>, transform_indices = @transform_3, window_bounds = array<i64: 32, 32>}, {pipeline_mode = #tpu.pipeline_mode<synchronous>, transform_indices = @transform_4, window_bounds = array<i64: 1, 32>}, {pipeline_mode = #tpu.pipeline_mode<synchronous>, transform_indices = @transform_5, window_bounds = array<i64: 32, 128>}, {pipeline_mode = #tpu.pipeline_mode<synchronous>, transform_indices = @transform_6, window_bounds = array<i64: 1, 128>}, {pipeline_mode = #tpu.pipeline_mode<synchronous>, transform_indices = @transform_7, window_bounds = array<i64: 128, 128>}, {pipeline_mode = #tpu.pipeline_mode<synchronous>, transform_indices = @transform_8, window_bounds = array<i64: 32, 128>}, {pipeline_mode = #tpu.pipeline_mode<synchronous>, transform_indices = @transform_9, window_bounds = array<i64: 1, 128>}, {transform_indices = @transform_10, window_bounds = array<i64: 16, 32>}, {transform_indices = @transform_11, window_bounds = array<i64: 16, 128>}]} {
    %c0 = arith.constant 0 : index
    %c0_0 = arith.constant 0 : index
    %0 = vector.load %arg1[%c0, %c0_0] : memref<16x16xf32, #tpu.memory_space<vmem>>, vector<16x16xf32>
    %c0_1 = arith.constant 0 : index
    %c0_2 = arith.constant 0 : index
    %1 = vector.load %arg2[%c0_1, %c0_2] : memref<16x32xf32, #tpu.memory_space<vmem>>, vector<16x32xf32>
    %cst = arith.constant dense<0.000000e+00> : vector<16x32xf32>
    %2 = tpu.matmul %0, %1, %cst {dimension_numbers = #tpu.dot_dimension_numbers<[1], [0], [0], [1], [0, 0, 1, 1], [], []>} : vector<16x16xf32>, vector<16x32xf32>, vector<16x32xf32> -> vector<16x32xf32>
    %c0_3 = arith.constant 0 : index
    %c0_4 = arith.constant 0 : index
    %3 = vector.load %arg3[%c0_3, %c0_4] : memref<1x32xf32, #tpu.memory_space<vmem>>, vector<1x32xf32>
    %4 = vector.broadcast %3 : vector<1x32xf32> to vector<16x32xf32>
    %5 = arith.addf %2, %4 : vector<16x32xf32>
    %cst_5 = arith.constant 0.000000e+00 : f32
    %6 = vector.broadcast %cst_5 : f32 to vector<16x32xf32>
    %7 = arith.maximumf %5, %6 : vector<16x32xf32>
    %c0_6 = arith.constant 0 : index
    %c0_7 = arith.constant 0 : index
    %8 = vector.load %arg4[%c0_6, %c0_7] : memref<32x32xf32, #tpu.memory_space<vmem>>, vector<32x32xf32>
    %cst_8 = arith.constant dense<0.000000e+00> : vector<16x32xf32>
    %9 = tpu.matmul %7, %8, %cst_8 {dimension_numbers = #tpu.dot_dimension_numbers<[1], [0], [0], [1], [0, 0, 1, 1], [], []>} : vector<16x32xf32>, vector<32x32xf32>, vector<16x32xf32> -> vector<16x32xf32>
    %c0_9 = arith.constant 0 : index
    %c0_10 = arith.constant 0 : index
    %10 = vector.load %arg5[%c0_9, %c0_10] : memref<1x32xf32, #tpu.memory_space<vmem>>, vector<1x32xf32>
    %11 = vector.broadcast %10 : vector<1x32xf32> to vector<16x32xf32>
    %12 = arith.addf %9, %11 : vector<16x32xf32>
    %cst_11 = arith.constant 0.000000e+00 : f32
    %13 = vector.broadcast %cst_11 : f32 to vector<16x32xf32>
    %14 = arith.maximumf %12, %13 : vector<16x32xf32>
    %cst_12 = arith.constant 1.250000e+00 : f32
    %15 = vector.broadcast %cst_12 : f32 to vector<16x32xf32>
    %16 = arith.mulf %14, %15 : vector<16x32xf32>
    %17 = arith.mulf %16, %16 : vector<16x32xf32>
    %cst_13 = arith.constant dense<0.000000e+00> : vector<16xf32>
    %18 = vector.multi_reduction <add>, %17, %cst_13 [1] : vector<16x32xf32> to vector<16xf32>
    %19 = vector.shape_cast %18 : vector<16xf32> to vector<16x1xf32>
    %c0_14 = arith.constant 0 : index
    %c0_15 = arith.constant 0 : index
    %20 = vector.load %arg6[%c0_14, %c0_15] : memref<32x128xf32, #tpu.memory_space<vmem>>, vector<32x128xf32>
    %cst_16 = arith.constant dense<0.000000e+00> : vector<16x128xf32>
    %21 = tpu.matmul %16, %20, %cst_16 {dimension_numbers = #tpu.dot_dimension_numbers<[1], [0], [0], [1], [0, 0, 1, 1], [], []>} : vector<16x32xf32>, vector<32x128xf32>, vector<16x128xf32> -> vector<16x128xf32>
    %c0_17 = arith.constant 0 : index
    %c0_18 = arith.constant 0 : index
    %22 = vector.load %arg7[%c0_17, %c0_18] : memref<1x128xf32, #tpu.memory_space<vmem>>, vector<1x128xf32>
    %23 = vector.broadcast %19 : vector<16x1xf32> to vector<16x128xf32>
    %24 = vector.broadcast %22 : vector<1x128xf32> to vector<16x128xf32>
    %25 = arith.addf %23, %24 : vector<16x128xf32>
    %cst_19 = arith.constant 2.000000e+00 : f32
    %26 = vector.broadcast %cst_19 : f32 to vector<16x128xf32>
    %27 = arith.mulf %26, %21 : vector<16x128xf32>
    %28 = arith.subf %25, %27 : vector<16x128xf32>
    %cst_20 = arith.constant 0.000000e+00 : f32
    %29 = vector.broadcast %cst_20 : f32 to vector<16x128xf32>
    %30 = arith.maximumf %28, %29 : vector<16x128xf32>
    %cst_21 = arith.constant -5.000000e-01 : f32
    %31 = vector.broadcast %cst_21 : f32 to vector<16x128xf32>
    %32 = arith.mulf %31, %30 : vector<16x128xf32>
    %33 = math.exp %32 : vector<16x128xf32>
    %cst_22 = arith.constant 1.300000e+00 : f32
    %34 = vector.broadcast %cst_22 : f32 to vector<16x128xf32>
    %35 = arith.mulf %34, %33 : vector<16x128xf32>
    %c0_23 = arith.constant 0 : index
    %c0_24 = arith.constant 0 : index
    %36 = vector.load %arg8[%c0_23, %c0_24] : memref<128x128xf32, #tpu.memory_space<vmem>>, vector<128x128xf32>
    %cst_25 = arith.constant dense<0.000000e+00> : vector<16x128xf32>
    %37 = tpu.matmul %35, %36, %cst_25 {dimension_numbers = #tpu.dot_dimension_numbers<[1], [0], [0], [1], [0, 0, 1, 1], [], []>} : vector<16x128xf32>, vector<128x128xf32>, vector<16x128xf32> -> vector<16x128xf32>
    %38 = arith.mulf %37, %35 : vector<16x128xf32>
    %cst_26 = arith.constant dense<0.000000e+00> : vector<16xf32>
    %39 = vector.multi_reduction <add>, %38, %cst_26 [1] : vector<16x128xf32> to vector<16xf32>
    %40 = vector.shape_cast %39 : vector<16xf32> to vector<16x1xf32>
    %cst_27 = arith.constant 1.300000e+00 : f32
    %41 = vector.broadcast %cst_27 : f32 to vector<16x1xf32>
    %42 = arith.addf %41, %40 : vector<16x1xf32>
    %cst_28 = arith.constant 9.99999996E-13 : f32
    %43 = vector.broadcast %cst_28 : f32 to vector<16x1xf32>
    %44 = arith.maximumf %42, %43 : vector<16x1xf32>
    %45 = math.rsqrt %44 : vector<16x1xf32>
    %46 = arith.mulf %44, %45 : vector<16x1xf32>
    %c0_29 = arith.constant 0 : index
    %c0_30 = arith.constant 0 : index
    %47 = vector.load %arg11[%c0_29, %c0_30] : memref<16x32xf32, #tpu.memory_space<vmem>>, vector<16x32xf32>
    %48 = vector.broadcast %46 : vector<16x1xf32> to vector<16x32xf32>
    %49 = arith.mulf %47, %48 : vector<16x32xf32>
    %50 = arith.addf %14, %49 : vector<16x32xf32>
    %c0_31 = arith.constant 0 : index
    %c0_32 = arith.constant 0 : index
    %51 = vector.load %arg9[%c0_31, %c0_32] : memref<32x128xf32, #tpu.memory_space<vmem>>, vector<32x128xf32>
    %cst_33 = arith.constant dense<0.000000e+00> : vector<16x128xf32>
    %52 = tpu.matmul %50, %51, %cst_33 {dimension_numbers = #tpu.dot_dimension_numbers<[1], [0], [0], [1], [0, 0, 1, 1], [], []>} : vector<16x32xf32>, vector<32x128xf32>, vector<16x128xf32> -> vector<16x128xf32>
    %c0_34 = arith.constant 0 : index
    %c0_35 = arith.constant 0 : index
    %53 = vector.load %arg10[%c0_34, %c0_35] : memref<1x128xf32, #tpu.memory_space<vmem>>, vector<1x128xf32>
    %54 = vector.broadcast %53 : vector<1x128xf32> to vector<16x128xf32>
    %55 = arith.addf %52, %54 : vector<16x128xf32>
    %cst_36 = arith.constant dense<0xFF800000> : vector<16xf32>
    %56 = vector.multi_reduction <maximumf>, %55, %cst_36 [1] : vector<16x128xf32> to vector<16xf32>
    %57 = vector.shape_cast %56 : vector<16xf32> to vector<16x1xf32>
    %58 = vector.broadcast %57 : vector<16x1xf32> to vector<16x128xf32>
    %59 = arith.subf %55, %58 : vector<16x128xf32>
    %60 = math.exp %59 : vector<16x128xf32>
    %cst_37 = arith.constant dense<0.000000e+00> : vector<16xf32>
    %61 = vector.multi_reduction <add>, %60, %cst_37 [1] : vector<16x128xf32> to vector<16xf32>
    %62 = vector.shape_cast %61 : vector<16xf32> to vector<16x1xf32>
    %63 = tpu.reciprocal %62 : vector<16x1xf32> -> vector<16x1xf32>
    %64 = vector.broadcast %63 : vector<16x1xf32> to vector<16x128xf32>
    %65 = arith.mulf %60, %64 : vector<16x128xf32>
    %66 = tpu.iota {dimensions = array<i32: 1>} : vector<16x128xi32>
    %67 = vector.shape_cast %42 : vector<16x1xf32> to vector<16x1xf32>
    %68 = vector.broadcast %67 : vector<16x1xf32> to vector<16x128xf32>
    %c8_i32 = arith.constant 8 : i32
    %69 = vector.broadcast %c8_i32 : i32 to vector<16x128xi32>
    %70 = arith.cmpi eq, %66, %69 : vector<16x128xi32>
    %71 = arith.select %70, %68, %65 : vector<16x128xi1>, vector<16x128xf32>
    %c0_38 = arith.constant 0 : index
    %c0_39 = arith.constant 0 : index
    %72 = vector.load %arg12[%c0_38, %c0_39] : memref<16x128xf32, #tpu.memory_space<vmem>>, vector<16x128xf32>
    tpu.vector_store %arg12[%c0_38, %c0_39], %71 {strides = array<i32>} : memref<16x128xf32, #tpu.memory_space<vmem>>, vector<16x128xf32>,
    return
  }
  func.func @transform_0(%arg0: i32) -> (i32, i32) {
    %c0_i32 = arith.constant 0 : i32
    %c0_i32_0 = arith.constant 0 : i32
    return %arg0, %c0_i32 : i32, i32
  }
  func.func @transform_1(%arg0: i32) -> (i32, i32) {
    %c0_i32 = arith.constant 0 : i32
    %c0_i32_0 = arith.constant 0 : i32
    %c0_i32_1 = arith.constant 0 : i32
    return %c0_i32, %c0_i32_0 : i32, i32
  }
  func.func @transform_2(%arg0: i32) -> (i32, i32) {
    %c0_i32 = arith.constant 0 : i32
    %c0_i32_0 = arith.constant 0 : i32
    %c0_i32_1 = arith.constant 0 : i32
    return %c0_i32, %c0_i32_0 : i32, i32
  }
  func.func @transform_3(%arg0: i32) -> (i32, i32) {
    %c0_i32 = arith.constant 0 : i32
    %c0_i32_0 = arith.constant 0 : i32
    %c0_i32_1 = arith.constant 0 : i32
    return %c0_i32, %c0_i32_0 : i32, i32
  }
  func.func @transform_4(%arg0: i32) -> (i32, i32) {
    %c0_i32 = arith.constant 0 : i32
    %c0_i32_0 = arith.constant 0 : i32
    %c0_i32_1 = arith.constant 0 : i32
    return %c0_i32, %c0_i32_0 : i32, i32
  }
  func.func @transform_5(%arg0: i32) -> (i32, i32) {
    %c0_i32 = arith.constant 0 : i32
    %c0_i32_0 = arith.constant 0 : i32
    %c0_i32_1 = arith.constant 0 : i32
    return %c0_i32, %c0_i32_0 : i32, i32
  }
  func.func @transform_6(%arg0: i32) -> (i32, i32) {
    %c0_i32 = arith.constant 0 : i32
    %c0_i32_0 = arith.constant 0 : i32
    %c0_i32_1 = arith.constant 0 : i32
    return %c0_i32, %c0_i32_0 : i32, i32
  }
  func.func @transform_7(%arg0: i32) -> (i32, i32) {
    %c0_i32 = arith.constant 0 : i32
    %c0_i32_0 = arith.constant 0 : i32
    %c0_i32_1 = arith.constant 0 : i32
    return %c0_i32, %c0_i32_0 : i32, i32
  }
  func.func @transform_8(%arg0: i32) -> (i32, i32) {
    %c0_i32 = arith.constant 0 : i32
    %c0_i32_0 = arith.constant 0 : i32
    %c0_i32_1 = arith.constant 0 : i32
    return %c0_i32, %c0_i32_0 : i32, i32
  }
  func.func @transform_9(%arg0: i32) -> (i32, i32) {
    %c0_i32 = arith.constant 0 : i32
    %c0_i32_0 = arith.constant 0 : i32
    %c0_i32_1 = arith.constant 0 : i32
    return %c0_i32, %c0_i32_0 : i32, i32
  }
  func.func @transform_10(%arg0: i32) -> (i32, i32) {
    %c0_i32 = arith.constant 0 : i32
    %c0_i32_0 = arith.constant 0 : i32
    return %arg0, %c0_i32 : i32, i32
  }
  func.func @transform_11(%arg0: i32) -> (i32, i32) {
    %c0_i32 = arith.constant 0 : i32
    %c0_i32_0 = arith.constant 0 : i32
    return %arg0, %c0_i32 : i32, i32
  }
}

</mosaic_0001>

<llo_original>
// kernel: tpu_custom_call.1
$region0: #{tpu_custom_call.1}
  #allocation0 [shape = 'u32[]', space=smem, size = 0x4, offset = 0x4, fixed_abs, tag = 'smem constant byte address 0x4 - core index']
  #allocation1 [shape = 'u32[144,128]{1,0:T(1,128)}', space=vmem, size = 0x12000, scoped, tag = 'internal scratch']
  %s0 = inlined_call_operand.hbm [shape: f32[16,16], index: 0, kind: input, shape index: {}]
  %s1 = inlined_call_operand.hbm [shape: f32[16,32], index: 1, kind: input, shape index: {}]
  %s2 = inlined_call_operand.vmem [shape: f32[1,32], index: 2, kind: input, shape index: {}]
  %s3 = inlined_call_operand.hbm [shape: f32[32,32], index: 3, kind: input, shape index: {}]
  %s4 = inlined_call_operand.vmem [shape: f32[1,32], index: 4, kind: input, shape index: {}]
  %s5 = inlined_call_operand.hbm [shape: f32[32,128], index: 5, kind: input, shape index: {}]
  %s6 = inlined_call_operand.hbm [shape: f32[1,128], index: 6, kind: input, shape index: {}]
  %s7 = inlined_call_operand.hbm [shape: f32[128,128], index: 7, kind: input, shape index: {}]
  %s8 = inlined_call_operand.hbm [shape: f32[32,128], index: 8, kind: input, shape index: {}]
  %s9 = inlined_call_operand.hbm [shape: f32[1,128], index: 9, kind: input, shape index: {}]
  %s10 = inlined_call_operand.vmem [shape: f32[16,32], index: 10, kind: input, shape index: {}]
  %s11 = inlined_call_operand.hbm [shape: f32[16,128], index: 11, kind: output, shape index: {}]
  %s12 = sld [smem:[#allocation0]]
  $region86: #{tpu_custom_call.1} parent=0
    _
  %s14 = ssub.s32 1, %s12
  %s15 = scalar_select 0, %s14, %s12
  $region1: #{tpu_custom_call.1} parent=0
    #allocation2 [shape = 'u8[8192]{0}', space=vmem, size = 0x2000, scoped, tag = 'input window, operand 0, single buffered']
    #allocation3 [shape = 's32[1]{0}', space=sflag, size = 0x4, scoped, tag = 'scoped memory for tpu_custom_call.1']
    #allocation4 [shape = 's32[1]{0}', space=sflag, size = 0x4, scoped, tag = 'scoped memory for tpu_custom_call.1']
    #allocation5 [shape = 'u8[8192]{0}', space=vmem, size = 0x2000, scoped, tag = 'input window, operand 1, single buffered']
    #allocation6 [shape = 's32[1]{0}', space=sflag, size = 0x4, scoped, tag = 'scoped memory for tpu_custom_call.1']
    #allocation7 [shape = 'u8[16384]{0}', space=vmem, size = 0x4000, scoped, tag = 'input window, operand 3, single buffered']
    #allocation8 [shape = 'u8[16384]{0}', space=vmem, size = 0x4000, scoped, tag = 'input window, operand 5, single buffered']
    #allocation9 [shape = 's32[1]{0}', space=sflag, size = 0x4, scoped, tag = 'scoped memory for tpu_custom_call.1']
    #allocation10 [shape = 'u8[512]{0}', space=vmem, size = 0x400, scoped, tag = 'input window, operand 6, single buffered']
    #allocation11 [shape = 'u8[65536]{0}', space=vmem, size = 0x10000, scoped, tag = 'input window, operand 7, single buffered']
    #allocation12 [shape = 's32[1]{0}', space=sflag, size = 0x4, scoped, tag = 'scoped memory for tpu_custom_call.1']
    #allocation13 [shape = 'u8[16384]{0}', space=vmem, size = 0x4000, scoped, tag = 'input window, operand 8, single buffered']
    #allocation14 [shape = 'u8[512]{0}', space=vmem, size = 0x400, scoped, tag = 'input window, operand 9, single buffered']
    #allocation15 [shape = 's32[1]{0}', space=sflag, size = 0x4, scoped, tag = 'scoped memory for tpu_custom_call.1']
    #allocation16 [shape = 'u8[8192]{0}', space=vmem, size = 0x2000, scoped, tag = 'output window, operand 0, single buffered']
    %16 = vsyncpa [#allocation3], 0
    %17 = vsyncpa [#allocation6], 0
    %18 = vsyncpa [#allocation9], 0
    %19 = vsyncpa [#allocation12], 0
    %20 = vsyncpa [#allocation15], 0
    %21 = vsyncpa [#allocation4], 0
    // Predicated region
    $region2: #{tpu_custom_call.1} parent=1 // pred_check
      _
    $region3: #{tpu_custom_call.1} parent=1 // pred_check_branch
      %23 = sbr.rel (0) target = $region5
    $region4: #{tpu_custom_call.1} parent=1 // pred_region
      %s25 = ssub.s32 256, 256
      %26 = vsyncadd [#allocation3], %s25
      %s27 = sshll.u32 [#allocation2], 4
      %s28 = int_to_ptr.vmem [resolvable:$true] %s27
      %33 = dma.hbm_to_vmem [thread:$0]  %s0, 256, %s28, [#allocation3], 128, 128, 8
    $region5: #{tpu_custom_call.1} parent=1 // pred_fallthru
      _
    // Predicated region
    $region6: #{tpu_custom_call.1} parent=1 // pred_check
      _
    $region7: #{tpu_custom_call.1} parent=1 // pred_check_branch
      %35 = sbr.rel (0) target = $region9
    $region8: #{tpu_custom_call.1} parent=1 // pred_region
      %s37 = ssub.s32 256, 256
      %38 = vsyncadd [#allocation6], %s37
      %s39 = sshll.u32 [#allocation5], 4
      %s40 = int_to_ptr.vmem [resolvable:$true] %s39
      %45 = dma.hbm_to_vmem [thread:$0]  %s1, 256, %s40, [#allocation6], 128, 128, 8
    $region9: #{tpu_custom_call.1} parent=1 // pred_fallthru
      _
    // Predicated region
    $region10: #{tpu_custom_call.1} parent=1 // pred_check
      _
    $region11: #{tpu_custom_call.1} parent=1 // pred_check_branch
      %47 = sbr.rel (0) target = $region13
    $region12: #{tpu_custom_call.1} parent=1 // pred_region
      _
    $region13: #{tpu_custom_call.1} parent=1 // pred_fallthru
      _
    // Predicated region
    $region14: #{tpu_custom_call.1} parent=1 // pred_check
      _
    $region15: #{tpu_custom_call.1} parent=1 // pred_check_branch
      %49 = sbr.rel (0) target = $region17
    $region16: #{tpu_custom_call.1} parent=1 // pred_region
      %s51 = ssub.s32 512, 512
      %52 = vsyncadd [#allocation6], %s51
      %s53 = sshll.u32 [#allocation7], 4
      %s54 = int_to_ptr.vmem [resolvable:$true] %s53
      %59 = dma.hbm_to_vmem [thread:$0]  %s3, 512, %s54, [#allocation6], 128, 128, 8
    $region17: #{tpu_custom_call.1} parent=1 // pred_fallthru
      _
    // Predicated region
    $region18: #{tpu_custom_call.1} parent=1 // pred_check
      _
    $region19: #{tpu_custom_call.1} parent=1 // pred_check_branch
      %61 = sbr.rel (0) target = $region21
    $region20: #{tpu_custom_call.1} parent=1 // pred_region
      _
    $region21: #{tpu_custom_call.1} parent=1 // pred_fallthru
      _
    // Predicated region
    $region22: #{tpu_custom_call.1} parent=1 // pred_check
      _
    $region23: #{tpu_custom_call.1} parent=1 // pred_check_branch
      %63 = sbr.rel (0) target = $region25
    $region24: #{tpu_custom_call.1} parent=1 // pred_region
      %s65 = ssub.s32 512, 512
      %66 = vsyncadd [#allocation9], %s65
      %s67 = sshll.u32 [#allocation8], 4
      %s68 = int_to_ptr.vmem [resolvable:$true] %s67
      %73 = dma.hbm_to_vmem [thread:$0]  %s5, 512, %s68, [#allocation9], 128, 128, 8
    $region25: #{tpu_custom_call.1} parent=1 // pred_fallthru
      _
    // Predicated region
    $region26: #{tpu_custom_call.1} parent=1 // pred_check
      _
    $region27: #{tpu_custom_call.1} parent=1 // pred_check_branch
      %75 = sbr.rel (0) target = $region29
    $region28: #{tpu_custom_call.1} parent=1 // pred_region
      %s77 = ssub.s32 16, 16
      %78 = vsyncadd [#allocation9], %s77
      %s80 = sshll.u32 [#allocation10], 4
      %s81 = int_to_ptr.vmem [resolvable:$true] %s80
      %83 = dma.hbm_to_vmem [thread:$0]  %s6, 16, %s81, [#allocation9]
    $region29: #{tpu_custom_call.1} parent=1 // pred_fallthru
      _
    // Predicated region
    $region30: #{tpu_custom_call.1} parent=1 // pred_check
      _
    $region31: #{tpu_custom_call.1} parent=1 // pred_check_branch
      %85 = sbr.rel (0) target = $region33
    $region32: #{tpu_custom_call.1} parent=1 // pred_region
      %s87 = ssub.s32 2048, 2048
      %88 = vsyncadd [#allocation12], %s87
      %s89 = sshll.u32 [#allocation11], 4
      %s90 = int_to_ptr.vmem [resolvable:$true] %s89
      %95 = dma.hbm_to_vmem [thread:$0]  %s7, 2048, %s90, [#allocation12], 128, 128, 8
    $region33: #{tpu_custom_call.1} parent=1 // pred_fallthru
      _
    // Predicated region
    $region34: #{tpu_custom_call.1} parent=1 // pred_check
      _
    $region35: #{tpu_custom_call.1} parent=1 // pred_check_branch
      %97 = sbr.rel (0) target = $region37
    $region36: #{tpu_custom_call.1} parent=1 // pred_region
      %s99 = ssub.s32 512, 512
      %100 = vsyncadd [#allocation12], %s99
      %s101 = sshll.u32 [#allocation13], 4
      %s102 = int_to_ptr.vmem [resolvable:$true] %s101
      %107 = dma.hbm_to_vmem [thread:$0]  %s8, 512, %s102, [#allocation12], 128, 128, 8
    $region37: #{tpu_custom_call.1} parent=1 // pred_fallthru
      _
    // Predicated region
    $region38: #{tpu_custom_call.1} parent=1 // pred_check
      _
    $region39: #{tpu_custom_call.1} parent=1 // pred_check_branch
      %109 = sbr.rel (0) target = $region41
    $region40: #{tpu_custom_call.1} parent=1 // pred_region
      %s111 = ssub.s32 16, 16
      %112 = vsyncadd [#allocation15], %s111
      %s114 = sshll.u32 [#allocation14], 4
      %s115 = int_to_ptr.vmem [resolvable:$true] %s114
      %117 = dma.hbm_to_vmem [thread:$0]  %s9, 16, %s115, [#allocation15]
    $region41: #{tpu_custom_call.1} parent=1 // pred_fallthru
      _
    // Predicated region
    $region42: #{tpu_custom_call.1} parent=1 // pred_check
      _
    $region43: #{tpu_custom_call.1} parent=1 // pred_check_branch
      %119 = sbr.rel (0) target = $region45
    $region44: #{tpu_custom_call.1} parent=1 // pred_region
      _
    $region45: #{tpu_custom_call.1} parent=1 // pred_fallthru
      _
    // Predicated region
    $region46: #{tpu_custom_call.1} parent=1 // pred_check
      _
    $region47: #{tpu_custom_call.1} parent=1 // pred_check_branch
      %121 = sbr.rel (0) target = $region49
    $region48: #{tpu_custom_call.1} parent=1 // pred_region
      %122 = dma.done [#allocation3], 256
    $region49: #{tpu_custom_call.1} parent=1 // pred_fallthru
      _
    // Predicated region
    $region50: #{tpu_custom_call.1} parent=1 // pred_check
      _
    $region51: #{tpu_custom_call.1} parent=1 // pred_check_branch
      %124 = sbr.rel (0) target = $region53
    $region52: #{tpu_custom_call.1} parent=1 // pred_region
      %125 = dma.done [#allocation6], 256
    $region53: #{tpu_custom_call.1} parent=1 // pred_fallthru
      _
    // Predicated region
    $region54: #{tpu_custom_call.1} parent=1 // pred_check
      _
    $region55: #{tpu_custom_call.1} parent=1 // pred_check_branch
      %127 = sbr.rel (0) target = $region57
    $region56: #{tpu_custom_call.1} parent=1 // pred_region
      %128 = dma.done [#allocation6], 512
    $region57: #{tpu_custom_call.1} parent=1 // pred_fallthru
      _
    // Predicated region
    $region58: #{tpu_custom_call.1} parent=1 // pred_check
      _
    $region59: #{tpu_custom_call.1} parent=1 // pred_check_branch
      %130 = sbr.rel (0) target = $region61
    $region60: #{tpu_custom_call.1} parent=1 // pred_region
      %131 = dma.done [#allocation9], 512
    $region61: #{tpu_custom_call.1} parent=1 // pred_fallthru
      _
    // Predicated region
    $region62: #{tpu_custom_call.1} parent=1 // pred_check
      _
    $region63: #{tpu_custom_call.1} parent=1 // pred_check_branch
      %133 = sbr.rel (0) target = $region65
    $region64: #{tpu_custom_call.1} parent=1 // pred_region
      %134 = dma.done [#allocation9], 16
    $region65: #{tpu_custom_call.1} parent=1 // pred_fallthru
      _
    // Predicated region
    $region66: #{tpu_custom_call.1} parent=1 // pred_check
      _
    $region67: #{tpu_custom_call.1} parent=1 // pred_check_branch
      %136 = sbr.rel (0) target = $region69
    $region68: #{tpu_custom_call.1} parent=1 // pred_region
      %137 = dma.done [#allocation12], 2048
    $region69: #{tpu_custom_call.1} parent=1 // pred_fallthru
      _
    // Predicated region
    $region70: #{tpu_custom_call.1} parent=1 // pred_check
      _
    $region71: #{tpu_custom_call.1} parent=1 // pred_check_branch
      %139 = sbr.rel (0) target = $region73
    $region72: #{tpu_custom_call.1} parent=1 // pred_region
      %140 = dma.done [#allocation12], 512
    $region73: #{tpu_custom_call.1} parent=1 // pred_fallthru
      _
    // Predicated region
    $region74: #{tpu_custom_call.1} parent=1 // pred_check
      _
    $region75: #{tpu_custom_call.1} parent=1 // pred_check_branch
      %142 = sbr.rel (0) target = $region77
    $region76: #{tpu_custom_call.1} parent=1 // pred_region
      %143 = dma.done [#allocation15], 16
    $region77: #{tpu_custom_call.1} parent=1 // pred_fallthru
      _
    %v144 = vld [vmem:[#allocation2] sm:$0xff]
    %v145 = vld [vmem:[#allocation2 + $0x8] sm:$0xff]
    %v146 = vld [vmem:[#allocation5] sm:$0xff]
    %v147 = vld [vmem:[#allocation5 + $0x8] sm:$0xff]
    %v148 = vld [vmem:[%s2] sm:$0x1]
    %v150 = vlaneseq
    %v151 = vshrl.u32 %v150, 7
    %v152 = vsub.s32 0, %v151
    %v153 = vrot.slane %v148, %v152
    %vm155 = vcmask 130048
    %v157 = vsel %vm155, %v144, 0
    %v160 = vsel %vm155, %v145, 0
    %162 = vmatprep.subr.mxu0 0.0
    %163 = vmatpush1.msra.mxu0 0.0
    %164 = vmatprep.subr.mxu0 0.0
    %165 = vmatpush1.msra.mxu0 0.0
    %166 = vmatprep.subr.mxu0 0.0
    %167 = vmatpush1.msra.mxu0 0.0
    %168 = vmatprep.subr.mxu0 0.0
    %169 = vmatpush1.msra.mxu0 0.0
    %170 = vmatprep.subr.mxu0 0.0
    %171 = vmatpush1.msra.mxu0 0.0
    %172 = vmatprep.subr.mxu0 0.0
    %173 = vmatpush1.msra.mxu0 0.0
    %174 = vmatprep.subr.mxu0 0.0
    %175 = vmatpush1.msra.mxu0 0.0
    %176 = vmatprep.subr.mxu0 0.0
    %177 = vmatpush1.msra.mxu0 0.0
    %178 = vmatprep.subr.mxu0 0.0
    %179 = vmatpush1.msra.mxu0 0.0
    %180 = vmatprep.subr.mxu0 0.0
    %181 = vmatpush1.msra.mxu0 0.0
    %182 = vmatprep.subr.mxu0 0.0
    %183 = vmatpush1.msra.mxu0 0.0
    %184 = vmatprep.subr.mxu0 0.0
    %185 = vmatpush1.msra.mxu0 0.0
    %186 = vmatprep.subr.mxu0 0.0
    %187 = vmatpush1.msra.mxu0 0.0
    %188 = vmatprep.subr.mxu0 0.0
    %189 = vmatpush1.msra.mxu0 0.0
    %190 = vmatprep.subr.mxu0 0.0
    %191 = vmatpush1.msra.mxu0 %v147
    %192 = vmatprep.subr.mxu0 0.0
    %193 = vmatpush1.msra.mxu0 %v146
    %194 = vmatprep.subr.mxu0 0.0
    %195 = vmatpush2.msra.mxu0 0.0
    %196 = vmatprep.subr.mxu0 0.0
    %197 = vmatpush2.msra.mxu0 0.0
    %198 = vmatprep.subr.mxu0 0.0
    %199 = vmatpush2.msra.mxu0 0.0
    %200 = vmatprep.subr.mxu0 0.0
    %201 = vmatpush2.msra.mxu0 0.0
    %202 = vmatprep.subr.mxu0 0.0
    %203 = vmatpush2.msra.mxu0 0.0
    %204 = vmatprep.subr.mxu0 0.0
    %205 = vmatpush2.msra.mxu0 0.0
    %206 = vmatprep.subr.mxu0 0.0
    %207 = vmatpush2.msra.mxu0 0.0
    %208 = vmatprep.subr.mxu0 0.0
    %209 = vmatpush2.msra.mxu0 0.0
    %210 = vmatprep.subr.mxu0 0.0
    %211 = vmatpush2.msra.mxu0 0.0
    %212 = vmatprep.subr.mxu0 0.0
    %213 = vmatpush2.msra.mxu0 0.0
    %214 = vmatprep.subr.mxu0 0.0
    %215 = vmatpush2.msra.mxu0 0.0
    %216 = vmatprep.subr.mxu0 0.0
    %217 = vmatpush2.msra.mxu0 0.0
    %218 = vmatprep.subr.mxu0 0.0
    %219 = vmatpush2.msra.mxu0 0.0
    %220 = vmatprep.subr.mxu0 0.0
    %221 = vmatpush2.msra.mxu0 0.0
    %222 = vmatprep.subr.mxu0 0.0
    %223 = vmatpush2.msra.mxu0 0.0
    %224 = vmatprep.subr.mxu0 0.0
    %225 = vmatpush2.msra.mxu0 0.0
    %226 = vmatprep.mubr.f32.mxu0 0.0
    %227 = vmatmul.mubr.f32.gmra.mxu0 %v157
    %v228 = vpop.f32.mrf.mxu0
    %v229 = vadd.f32 %v153, %v228
    %v230 = vpop.f32.mrf.mxu0
    %231 = vmatprep.mubr.f32.mxu0 0.0
    %232 = vmatmul.mubr.f32.gmra.mxu0 %v160
    %v233 = vpop.f32.mrf.mxu0
    %v234 = vadd.f32 %v153, %v233
    %v235 = vpop.f32.mrf.mxu0
    %236 = vdwg.mxu0
    %v237 = vmax.f32 %v229, 0.0
    %v238 = vmax.f32 %v234, 0.0
    %v239 = vld [vmem:[#allocation7] sm:$0xff]
    %v240 = vld [vmem:[#allocation7 + $0x8] sm:$0xff]
    %v241 = vld [vmem:[#allocation7 + $0x10] sm:$0xff]
    %v242 = vld [vmem:[#allocation7 + $0x18] sm:$0xff]
    %v243 = vld [vmem:[%s4] sm:$0x1]
    %v245 = vlaneseq
    %v246 = vshrl.u32 %v245, 7
    %v247 = vsub.s32 0, %v246
    %v248 = vrot.slane %v243, %v247
    %vm250 = vcmask 261120
    %v252 = vsel %vm250, %v237, 0
    %v255 = vsel %vm250, %v238, 0
    %257 = vmatprep.subr.mxu0 0.0
    %258 = vmatpush1.msra.mxu0 0.0
    %259 = vmatprep.subr.mxu0 0.0
    %260 = vmatpush1.msra.mxu0 0.0
    %261 = vmatprep.subr.mxu0 0.0
    %262 = vmatpush1.msra.mxu0 0.0
    %263 = vmatprep.subr.mxu0 0.0
    %264 = vmatpush1.msra.mxu0 0.0
    %265 = vmatprep.subr.mxu0 0.0
    %266 = vmatpush1.msra.mxu0 0.0
    %267 = vmatprep.subr.mxu0 0.0
    %268 = vmatpush1.msra.mxu0 0.0
    %269 = vmatprep.subr.mxu0 0.0
    %270 = vmatpush1.msra.mxu0 0.0
    %271 = vmatprep.subr.mxu0 0.0
    %272 = vmatpush1.msra.mxu0 0.0
    %273 = vmatprep.subr.mxu0 0.0
    %274 = vmatpush1.msra.mxu0 0.0
    %275 = vmatprep.subr.mxu0 0.0
    %276 = vmatpush1.msra.mxu0 0.0
    %277 = vmatprep.subr.mxu0 0.0
    %278 = vmatpush1.msra.mxu0 0.0
    %279 = vmatprep.subr.mxu0 0.0
    %280 = vmatpush1.msra.mxu0 0.0
    %281 = vmatprep.subr.mxu0 0.0
    %282 = vmatpush1.msra.mxu0 %v242
    %283 = vmatprep.subr.mxu0 0.0
    %284 = vmatpush1.msra.mxu0 %v241
    %285 = vmatprep.subr.mxu0 0.0
    %286 = vmatpush1.msra.mxu0 %v240
    %287 = vmatprep.subr.mxu0 0.0
    %288 = vmatpush1.msra.mxu0 %v239
    %289 = vmatprep.subr.mxu0 0.0
    %290 = vmatpush2.msra.mxu0 0.0
    %291 = vmatprep.subr.mxu0 0.0
    %292 = vmatpush2.msra.mxu0 0.0
    %293 = vmatprep.subr.mxu0 0.0
    %294 = vmatpush2.msra.mxu0 0.0
    %295 = vmatprep.subr.mxu0 0.0
    %296 = vmatpush2.msra.mxu0 0.0
    %297 = vmatprep.subr.mxu0 0.0
    %298 = vmatpush2.msra.mxu0 0.0
    %299 = vmatprep.subr.mxu0 0.0
    %300 = vmatpush2.msra.mxu0 0.0
    %301 = vmatprep.subr.mxu0 0.0
    %302 = vmatpush2.msra.mxu0 0.0
    %303 = vmatprep.subr.mxu0 0.0
    %304 = vmatpush2.msra.mxu0 0.0
    %305 = vmatprep.subr.mxu0 0.0
    %306 = vmatpush2.msra.mxu0 0.0
    %307 = vmatprep.subr.mxu0 0.0
    %308 = vmatpush2.msra.mxu0 0.0
    %309 = vmatprep.subr.mxu0 0.0
    %310 = vmatpush2.msra.mxu0 0.0
    %311 = vmatprep.subr.mxu0 0.0
    %312 = vmatpush2.msra.mxu0 0.0
    %313 = vmatprep.subr.mxu0 0.0
    %314 = vmatpush2.msra.mxu0 0.0
    %315 = vmatprep.subr.mxu0 0.0
    %316 = vmatpush2.msra.mxu0 0.0
    %317 = vmatprep.subr.mxu0 0.0
    %318 = vmatpush2.msra.mxu0 0.0
    %319 = vmatprep.subr.mxu0 0.0
    %320 = vmatpush2.msra.mxu0 0.0
    %321 = vmatprep.mubr.f32.mxu0 0.0
    %322 = vmatmul.mubr.f32.gmra.mxu0 %v252
    %v323 = vpop.f32.mrf.mxu0
    %v324 = vadd.f32 %v248, %v323
    %v325 = vpop.f32.mrf.mxu0
    %326 = vmatprep.mubr.f32.mxu0 0.0
    %327 = vmatmul.mubr.f32.gmra.mxu0 %v255
    %v328 = vpop.f32.mrf.mxu0
    %v329 = vadd.f32 %v248, %v328
    %v330 = vpop.f32.mrf.mxu0
    %331 = vdwg.mxu0
    %v332 = vmax.f32 %v324, 0.0
    %v333 = vmax.f32 %v329, 0.0
    %v334 = vmul.f32 %v332, 1.25
    %v335 = vmul.f32 %v333, 1.25
    %v336 = vmul.f32 %v334, %v334
    %v337 = vmul.f32 %v335, %v335
    %v338 = vsel %vm250, %v336, 0.0
    %339 = vadd.xlane.f32.xlu0 %v338
    %v340 = vpop.xlane.xlu0 %339
    %v341 = vsel %vm250, %v337, 0.0
    %342 = vadd.xlane.f32.xlu0 %v341
    %v343 = vpop.xlane.xlu0 %342
    %v344 = vld [vmem:[#allocation8] sm:$0xff]
    %v345 = vld [vmem:[#allocation8 + $0x8] sm:$0xff]
    %v346 = vld [vmem:[#allocation8 + $0x10] sm:$0xff]
    %v347 = vld [vmem:[#allocation8 + $0x18] sm:$0xff]
    %v349 = vsel %vm250, %v334, 0
    %v352 = vsel %vm250, %v335, 0
    %354 = vmatprep.subr.mxu0 0.0
    %355 = vmatpush1.msra.mxu0 0.0
    %356 = vmatprep.subr.mxu0 0.0
    %357 = vmatpush1.msra.mxu0 0.0
    %358 = vmatprep.subr.mxu0 0.0
    %359 = vmatpush1.msra.mxu0 0.0
    %360 = vmatprep.subr.mxu0 0.0
    %361 = vmatpush1.msra.mxu0 0.0
    %362 = vmatprep.subr.mxu0 0.0
    %363 = vmatpush1.msra.mxu0 0.0
    %364 = vmatprep.subr.mxu0 0.0
    %365 = vmatpush1.msra.mxu0 0.0
    %366 = vmatprep.subr.mxu0 0.0
    %367 = vmatpush1.msra.mxu0 0.0
    %368 = vmatprep.subr.mxu0 0.0
    %369 = vmatpush1.msra.mxu0 0.0
    %370 = vmatprep.subr.mxu0 0.0
    %371 = vmatpush1.msra.mxu0 0.0
    %372 = vmatprep.subr.mxu0 0.0
    %373 = vmatpush1.msra.mxu0 0.0
    %374 = vmatprep.subr.mxu0 0.0
    %375 = vmatpush1.msra.mxu0 0.0
    %376 = vmatprep.subr.mxu0 0.0
    %377 = vmatpush1.msra.mxu0 0.0
    %378 = vmatprep.subr.mxu0 0.0
    %379 = vmatpush1.msra.mxu0 %v347
    %380 = vmatprep.subr.mxu0 0.0
    %381 = vmatpush1.msra.mxu0 %v346
    %382 = vmatprep.subr.mxu0 0.0
    %383 = vmatpush1.msra.mxu0 %v345
    %384 = vmatprep.subr.mxu0 0.0
    %385 = vmatpush1.msra.mxu0 %v344
    %386 = vmatprep.subr.mxu0 0.0
    %387 = vmatpush2.msra.mxu0 0.0
    %388 = vmatprep.subr.mxu0 0.0
    %389 = vmatpush2.msra.mxu0 0.0
    %390 = vmatprep.subr.mxu0 0.0
    %391 = vmatpush2.msra.mxu0 0.0
    %392 = vmatprep.subr.mxu0 0.0
    %393 = vmatpush2.msra.mxu0 0.0
    %394 = vmatprep.subr.mxu0 0.0
    %395 = vmatpush2.msra.mxu0 0.0
    %396 = vmatprep.subr.mxu0 0.0
    %397 = vmatpush2.msra.mxu0 0.0
    %398 = vmatprep.subr.mxu0 0.0
    %399 = vmatpush2.msra.mxu0 0.0
    %400 = vmatprep.subr.mxu0 0.0
    %401 = vmatpush2.msra.mxu0 0.0
    %402 = vmatprep.subr.mxu0 0.0
    %403 = vmatpush2.msra.mxu0 0.0
    %404 = vmatprep.subr.mxu0 0.0
    %405 = vmatpush2.msra.mxu0 0.0
    %406 = vmatprep.subr.mxu0 0.0
    %407 = vmatpush2.msra.mxu0 0.0
    %408 = vmatprep.subr.mxu0 0.0
    %409 = vmatpush2.msra.mxu0 0.0
    %410 = vmatprep.subr.mxu0 0.0
    %411 = vmatpush2.msra.mxu0 0.0
    %412 = vmatprep.subr.mxu0 0.0
    %413 = vmatpush2.msra.mxu0 0.0
    %414 = vmatprep.subr.mxu0 0.0
    %415 = vmatpush2.msra.mxu0 0.0
    %416 = vmatprep.subr.mxu0 0.0
    %417 = vmatpush2.msra.mxu0 0.0
    %418 = vmatprep.mubr.f32.mxu0 0.0
    %419 = vmatmul.mubr.f32.gmra.mxu0 %v349
    %v420 = vpop.f32.mrf.mxu0
    %v421 = vadd.f32 0.0, %v420
    %v422 = vpop.f32.mrf.mxu0
    %423 = vmatprep.mubr.f32.mxu0 0.0
    %424 = vmatmul.mubr.f32.gmra.mxu0 %v352
    %v425 = vpop.f32.mrf.mxu0
    %v426 = vadd.f32 0.0, %v425
    %v427 = vpop.f32.mrf.mxu0
    %428 = vdwg.mxu0
    %v429 = vld [vmem:[#allocation10] sm:$0x1]
    %v431 = vlaneseq
    %v432 = vshrl.u32 %v431, 7
    %v433 = vsub.s32 0, %v432
    %v434 = vrot.slane %v429, %v433
    %v436 = vadd.f32 %v340, %v434
    %v437 = vadd.f32 %v343, %v434
    %v438 = vmul.f32 %v421, 2.0
    %v439 = vmul.f32 %v426, 2.0
    %v440 = vsub.f32 %v436, %v438
    %v441 = vsub.f32 %v437, %v439
    %v442 = vmax.f32 %v440, 0.0
    %v443 = vmax.f32 %v441, 0.0
    %v444 = vmul.f32 %v442, -0.5
    %v445 = vmul.f32 %v443, -0.5
    %v446 = vmul.f32 %v444, 1.442695
    %v447 = vpow.pop %v446
    %v448 = vmul.f32 %v445, 1.442695
    %v449 = vpow.pop %v448
    %v450 = vmul.f32 %v447, 1.3
    %v451 = vmul.f32 %v449, 1.3
    %v452 = vld [vmem:[#allocation11] sm:$0xff]
    %v453 = vld [vmem:[#allocation11 + $0x8] sm:$0xff]
    %v454 = vld [vmem:[#allocation11 + $0x10] sm:$0xff]
    %v455 = vld [vmem:[#allocation11 + $0x18] sm:$0xff]
    %v456 = vld [vmem:[#allocation11 + $0x20] sm:$0xff]
    %v457 = vld [vmem:[#allocation11 + $0x28] sm:$0xff]
    %v458 = vld [vmem:[#allocation11 + $0x30] sm:$0xff]
    %v459 = vld [vmem:[#allocation11 + $0x38] sm:$0xff]
    %v460 = vld [vmem:[#allocation11 + $0x40] sm:$0xff]
    %v461 = vld [vmem:[#allocation11 + $0x48] sm:$0xff]
    %v462 = vld [vmem:[#allocation11 + $0x50] sm:$0xff]
    %v463 = vld [vmem:[#allocation11 + $0x58] sm:$0xff]
    %v464 = vld [vmem:[#allocation11 + $0x60] sm:$0xff]
    %v465 = vld [vmem:[#allocation11 + $0x68] sm:$0xff]
    %v466 = vld [vmem:[#allocation11 + $0x70] sm:$0xff]
    %v467 = vld [vmem:[#allocation11 + $0x78] sm:$0xff]
    %468 = vmatprep.subr.mxu0 0.0
    %469 = vmatpush1.msra.mxu0 %v467
    %470 = vmatprep.subr.mxu0 0.0
    %471 = vmatpush1.msra.mxu0 %v466
    %472 = vmatprep.subr.mxu0 0.0
    %473 = vmatpush1.msra.mxu0 %v465
    %474 = vmatprep.subr.mxu0 0.0
    %475 = vmatpush1.msra.mxu0 %v464
    %476 = vmatprep.subr.mxu0 0.0
    %477 = vmatpush1.msra.mxu0 %v463
    %478 = vmatprep.subr.mxu0 0.0
    %479 = vmatpush1.msra.mxu0 %v462
    %480 = vmatprep.subr.mxu0 0.0
    %481 = vmatpush1.msra.mxu0 %v461
    %482 = vmatprep.subr.mxu0 0.0
    %483 = vmatpush1.msra.mxu0 %v460
    %484 = vmatprep.subr.mxu0 0.0
    %485 = vmatpush1.msra.mxu0 %v459
    %486 = vmatprep.subr.mxu0 0.0
    %487 = vmatpush1.msra.mxu0 %v458
    %488 = vmatprep.subr.mxu0 0.0
    %489 = vmatpush1.msra.mxu0 %v457
    %490 = vmatprep.subr.mxu0 0.0
    %491 = vmatpush1.msra.mxu0 %v456
    %492 = vmatprep.subr.mxu0 0.0
    %493 = vmatpush1.msra.mxu0 %v455
    %494 = vmatprep.subr.mxu0 0.0
    %495 = vmatpush1.msra.mxu0 %v454
    %496 = vmatprep.subr.mxu0 0.0
    %497 = vmatpush1.msra.mxu0 %v453
    %498 = vmatprep.subr.mxu0 0.0
    %499 = vmatpush1.msra.mxu0 %v452
    %500 = vmatprep.subr.mxu0 0.0
    %501 = vmatpush2.msra.mxu0 0.0
    %502 = vmatprep.subr.mxu0 0.0
    %503 = vmatpush2.msra.mxu0 0.0
    %504 = vmatprep.subr.mxu0 0.0
    %505 = vmatpush2.msra.mxu0 0.0
    %506 = vmatprep.subr.mxu0 0.0
    %507 = vmatpush2.msra.mxu0 0.0
    %508 = vmatprep.subr.mxu0 0.0
    %509 = vmatpush2.msra.mxu0 0.0
    %510 = vmatprep.subr.mxu0 0.0
    %511 = vmatpush2.msra.mxu0 0.0
    %512 = vmatprep.subr.mxu0 0.0
    %513 = vmatpush2.msra.mxu0 0.0
    %514 = vmatprep.subr.mxu0 0.0
    %515 = vmatpush2.msra.mxu0 0.0
    %516 = vmatprep.subr.mxu0 0.0
    %517 = vmatpush2.msra.mxu0 0.0
    %518 = vmatprep.subr.mxu0 0.0
    %519 = vmatpush2.msra.mxu0 0.0
    %520 = vmatprep.subr.mxu0 0.0
    %521 = vmatpush2.msra.mxu0 0.0
    %522 = vmatprep.subr.mxu0 0.0
    %523 = vmatpush2.msra.mxu0 0.0
    %524 = vmatprep.subr.mxu0 0.0
    %525 = vmatpush2.msra.mxu0 0.0
    %526 = vmatprep.subr.mxu0 0.0
    %527 = vmatpush2.msra.mxu0 0.0
    %528 = vmatprep.subr.mxu0 0.0
    %529 = vmatpush2.msra.mxu0 0.0
    %530 = vmatprep.subr.mxu0 0.0
    %531 = vmatpush2.msra.mxu0 0.0
    %532 = vmatprep.mubr.f32.mxu0 0.0
    %533 = vmatmul.mubr.f32.gmra.mxu0 %v450
    %v534 = vpop.f32.mrf.mxu0
    %v535 = vadd.f32 0.0, %v534
    %v536 = vpop.f32.mrf.mxu0
    %537 = vmatprep.mubr.f32.mxu0 0.0
    %538 = vmatmul.mubr.f32.gmra.mxu0 %v451
    %v539 = vpop.f32.mrf.mxu0
    %v540 = vadd.f32 0.0, %v539
    %v541 = vpop.f32.mrf.mxu0
    %542 = vdwg.mxu0
    %v543 = vmul.f32 %v535, %v450
    %v544 = vmul.f32 %v540, %v451
    %545 = vadd.xlane.f32.xlu0 %v543
    %v546 = vpop.xlane.xlu0 %545
    %547 = vadd.xlane.f32.xlu0 %v544
    %v548 = vpop.xlane.xlu0 %547
    %v549 = vadd.f32 %v546, 1.3
    %v550 = vadd.f32 %v548, 1.3
    %v551 = vmax.f32 %v549, 1e-12
    %v552 = vmax.f32 %v550, 1e-12
    %v553 = vrsqrt.pop %v551
    %v554 = vrsqrt.pop %v552
    %v555 = vmul.f32 %v551, %v553
    %v556 = vmul.f32 %v552, %v554
    %v557 = vld [vmem:[%s10] sm:$0xff]
    %v558 = vld [vmem:[%s10 + $0x8] sm:$0xff]
    %v559 = vmul.f32 %v557, %v555
    %v560 = vmul.f32 %v558, %v556
    %v561 = vadd.f32 %v332, %v559
    %v562 = vadd.f32 %v333, %v560
    %v563 = vld [vmem:[#allocation13] sm:$0xff]
    %v564 = vld [vmem:[#allocation13 + $0x8] sm:$0xff]
    %v565 = vld [vmem:[#allocation13 + $0x10] sm:$0xff]
    %v566 = vld [vmem:[#allocation13 + $0x18] sm:$0xff]
    %v567 = vld [vmem:[#allocation14] sm:$0x1]
    %v569 = vlaneseq
    %v570 = vshrl.u32 %v569, 7
    %v571 = vsub.s32 0, %v570
    %v572 = vrot.slane %v567, %v571
    %v575 = vsel %vm250, %v561, 0
    %v578 = vsel %vm250, %v562, 0
    %580 = vmatprep.subr.mxu0 0.0
    %581 = vmatpush1.msra.mxu0 0.0
    %582 = vmatprep.subr.mxu0 0.0
    %583 = vmatpush1.msra.mxu0 0.0
    %584 = vmatprep.subr.mxu0 0.0
    %585 = vmatpush1.msra.mxu0 0.0
    %586 = vmatprep.subr.mxu0 0.0
    %587 = vmatpush1.msra.mxu0 0.0
    %588 = vmatprep.subr.mxu0 0.0
    %589 = vmatpush1.msra.mxu0 0.0
    %590 = vmatprep.subr.mxu0 0.0
    %591 = vmatpush1.msra.mxu0 0.0
    %592 = vmatprep.subr.mxu0 0.0
    %593 = vmatpush1.msra.mxu0 0.0
    %594 = vmatprep.subr.mxu0 0.0
    %595 = vmatpush1.msra.mxu0 0.0
    %596 = vmatprep.subr.mxu0 0.0
    %597 = vmatpush1.msra.mxu0 0.0
    %598 = vmatprep.subr.mxu0 0.0
    %599 = vmatpush1.msra.mxu0 0.0
    %600 = vmatprep.subr.mxu0 0.0
    %601 = vmatpush1.msra.mxu0 0.0
    %602 = vmatprep.subr.mxu0 0.0
    %603 = vmatpush1.msra.mxu0 0.0
    %604 = vmatprep.subr.mxu0 0.0
    %605 = vmatpush1.msra.mxu0 %v566
    %606 = vmatprep.subr.mxu0 0.0
    %607 = vmatpush1.msra.mxu0 %v565
    %608 = vmatprep.subr.mxu0 0.0
    %609 = vmatpush1.msra.mxu0 %v564
    %610 = vmatprep.subr.mxu0 0.0
    %611 = vmatpush1.msra.mxu0 %v563
    %612 = vmatprep.subr.mxu0 0.0
    %613 = vmatpush2.msra.mxu0 0.0
    %614 = vmatprep.subr.mxu0 0.0
    %615 = vmatpush2.msra.mxu0 0.0
    %616 = vmatprep.subr.mxu0 0.0
    %617 = vmatpush2.msra.mxu0 0.0
    %618 = vmatprep.subr.mxu0 0.0
    %619 = vmatpush2.msra.mxu0 0.0
    %620 = vmatprep.subr.mxu0 0.0
    %621 = vmatpush2.msra.mxu0 0.0
    %622 = vmatprep.subr.mxu0 0.0
    %623 = vmatpush2.msra.mxu0 0.0
    %624 = vmatprep.subr.mxu0 0.0
    %625 = vmatpush2.msra.mxu0 0.0
    %626 = vmatprep.subr.mxu0 0.0
    %627 = vmatpush2.msra.mxu0 0.0
    %628 = vmatprep.subr.mxu0 0.0
    %629 = vmatpush2.msra.mxu0 0.0
    %630 = vmatprep.subr.mxu0 0.0
    %631 = vmatpush2.msra.mxu0 0.0
    %632 = vmatprep.subr.mxu0 0.0
    %633 = vmatpush2.msra.mxu0 0.0
    %634 = vmatprep.subr.mxu0 0.0
    %635 = vmatpush2.msra.mxu0 0.0
    %636 = vmatprep.subr.mxu0 0.0
    %637 = vmatpush2.msra.mxu0 0.0
    %638 = vmatprep.subr.mxu0 0.0
    %639 = vmatpush2.msra.mxu0 0.0
    %640 = vmatprep.subr.mxu0 0.0
    %641 = vmatpush2.msra.mxu0 0.0
    %642 = vmatprep.subr.mxu0 0.0
    %643 = vmatpush2.msra.mxu0 0.0
    %644 = vmatprep.mubr.f32.mxu0 0.0
    %645 = vmatmul.mubr.f32.gmra.mxu0 %v575
    %v646 = vpop.f32.mrf.mxu0
    %v647 = vadd.f32 %v572, %v646
    %v648 = vpop.f32.mrf.mxu0
    %649 = vmatprep.mubr.f32.mxu0 0.0
    %650 = vmatmul.mubr.f32.gmra.mxu0 %v578
    %v651 = vpop.f32.mrf.mxu0
    %v652 = vadd.f32 %v572, %v651
    %v653 = vpop.f32.mrf.mxu0
    %654 = vdwg.mxu0
    %655 = vmax.xlane.f32.xlu0 %v647
    %v656 = vpop.xlane.xlu0 %655
    %657 = vmax.xlane.f32.xlu0 %v652
    %v658 = vpop.xlane.xlu0 %657
    %v659 = vsub.f32 %v647, %v656
    %v660 = vsub.f32 %v652, %v658
    %v661 = vmul.f32 %v659, 1.442695
    %v662 = vpow.pop %v661
    %v663 = vmul.f32 %v660, 1.442695
    %v664 = vpow.pop %v663
    %665 = vadd.xlane.f32.xlu0 %v662
    %v666 = vpop.xlane.xlu0 %665
    %667 = vadd.xlane.f32.xlu0 %v664
    %v668 = vpop.xlane.xlu0 %667
    %v669 = vrcp.pop %v666
    %v670 = vrcp.pop %v668
    %v671 = vmul.f32 %v662, %v669
    %v672 = vmul.f32 %v664, %v670
    %v673 = vlaneseq
    %v674 = vand.u32 %v673, 127
    %vm675 = vcmp.eq.s32.totalorder %v674, 8
    %v676 = vsel %vm675, %v549, %v671
    %v677 = vsel %vm675, %v550, %v672
    %678 = vst [vmem:[#allocation16] sm:$0xff] %v676
    %679 = vst [vmem:[#allocation16 + $0x8] sm:$0xff] %v677
    // Predicated region
    $region78: #{tpu_custom_call.1} parent=1 // pred_check
      _
    $region79: #{tpu_custom_call.1} parent=1 // pred_check_branch
      %681 = sbr.rel (0) target = $region81
    $region80: #{tpu_custom_call.1} parent=1 // pred_region
      %s683 = ssub.s32 256, 256
      %684 = vsyncadd [#allocation4], %s683
      %s685 = sshll.u32 [#allocation16], 4
      %s686 = int_to_ptr.vmem [resolvable:$true] %s685
      %691 = dma.vmem_to_hbm [thread:$0]  %s686, 256, %s11, [#allocation4], 128, 128, 8
    $region81: #{tpu_custom_call.1} parent=1 // pred_fallthru
      _
    // Predicated region
    $region82: #{tpu_custom_call.1} parent=1 // pred_check
      _
    $region83: #{tpu_custom_call.1} parent=1 // pred_check_branch
      %693 = sbr.rel (0) target = $region85
    $region84: #{tpu_custom_call.1} parent=1 // pred_region
      %694 = dma.done [#allocation4], 256
    $region85: #{tpu_custom_call.1} parent=1 // pred_fallthru
      _
    %695 = vsyncpa [#allocation3], 1
    %696 = vsyncpa [#allocation6], 1
    %697 = vsyncpa [#allocation9], 1
    %698 = vsyncpa [#allocation12], 1
    %699 = vsyncpa [#allocation15], 1
    %700 = vsyncpa [#allocation4], 1

</llo_original>
